<compile_context>
chip_gen: v5e
topology: v5e:2x2
jax: 0.10.0
libtpu: 0.0.40
codegen_flags: <defaults>
</compile_context>

<pallas_src>
import functools

import jax
import jax.numpy as jnp
from jax import lax
from jax.experimental import pallas as pl
from jax.experimental.pallas import tpu as pltpu


def _group_kernel(num_group, group_size,
                  start_ref,                 # SMEM prefetch: (B,) int32 FPS start points
                  x_ref, pts3t_ref,          # (N, 6) and (3, N) views of one batch
                  nb_ref, nn_ref, c_ref,     # (3, M*G), (3, M*G), (3, G) channel-major outputs
                  cent_ref, sel_ref):        # VMEM scratch: (G, 3) centers, (M*G, N) one-hot
    G = num_group
    M = group_size
    b = pl.program_id(0)

    x = x_ref[...].astype(jnp.float32)            # (N, 6)
    pts3_t = pts3t_ref[...].astype(jnp.float32)   # (3, N) channel-major xyz
    N = x.shape[0]

    px = pts3_t[0:1, :]                           # (1, N) lane-major coordinate rows
    py = pts3_t[1:2, :]
    pz = pts3_t[2:3, :]
    lane_iota = lax.broadcasted_iota(jnp.int32, (1, N), 1)

    start = start_ref[b]                          # random (externally supplied) start index

    # ---------------- farthest point sampling: pick G centers ----------------
    def fps_body(i, carry):
        dist, cur = carry
        row = x_ref[pl.ds(cur, 1), :]             # (1, 6) dynamic sublane load of current point
        cur_xyz = row[:, 0:3]                     # (1, 3)
        cent_ref[pl.ds(i, 1), :] = cur_xyz        # record center i (dynamic store, no carry)
        cx = jnp.sum(row[:, 0:1])                 # scalar coordinates of current point
        cy = jnp.sum(row[:, 1:2])
        cz = jnp.sum(row[:, 2:3])
        d = (px - cx) ** 2 + (py - cy) ** 2 + (pz - cz) ** 2      # (1, N) lane-major
        dist = jnp.minimum(dist, d)
        maxv = jnp.max(dist)
        nxt = jnp.min(jnp.where(dist == maxv, lane_iota, N)).astype(jnp.int32)
        return dist, nxt

    dist0 = jnp.full((1, N), 1e30, dtype=jnp.float32)
    lax.fori_loop(0, G, fps_body, (dist0, start))

    centers = cent_ref[...]                       # (G, 3)

    # ------------- kNN distances on the MXU: ||c||^2 + ||p||^2 - 2 c.p -------------
    c_sq = jnp.sum(centers * centers, axis=1, keepdims=True)              # (G, 1)
    p_sq = px * px + py * py + pz * pz                                     # (1, N)
    cross = jnp.dot(centers, pts3_t, preferred_element_type=jnp.float32)   # (G, N)
    dists0 = c_sq + p_sq - 2.0 * cross                                     # (G, N)

    gn_iota = lax.broadcasted_iota(jnp.int32, (G, N), 1)

    # ------------- iterative top-M selection, one-hot rows into VMEM scratch -------------
    def knn_body(k, dists):
        minv = jnp.min(dists, axis=1, keepdims=True)                                    # (G, 1)
        idx = jnp.min(jnp.where(dists == minv, gn_iota, N), axis=1, keepdims=True)      # (G, 1)
        onehot = gn_iota == idx                                                         # (G, N)
        off = k * G
        if G % 8 == 0:
            off = pl.multiple_of(off, 8)
        sel_ref[pl.ds(off, G), :] = onehot.astype(jnp.float32)   # full-lane (unmasked) store
        return jnp.where(onehot, jnp.float32(1e30), dists)       # mask already-picked points

    lax.fori_loop(0, M, knn_body, dists0)

    # ------------- single batched one-hot gather on the MXU -------------
    res = jnp.dot(sel_ref[...], x, preferred_element_type=jnp.float32)     # (M*G, 6)
    res_cm = jnp.transpose(res)                                            # (6, M*G) channel-major

    centers_t = jnp.transpose(centers)                                     # (3, G)
    c_ref[...] = centers_t
    centers_rep = jnp.tile(centers_t, (1, M))                              # (3, M*G), col j -> group j%G

    nb_ref[...] = res_cm[0:3, :] - centers_rep                             # center-subtracted xyz
    nn_ref[...] = res_cm[3:6, :]                                           # raw normals


def group_forward(xyz, num_group, group_size, start_idx):
    """xyz: (B, N, 6) float32, start_idx: (B,) int32 random FPS start points.

    Returns (neighborhood_no_normal (B,G,M,3), neighborhood_only_normal (B,G,M,3),
             center (B,G,3)) matching the PyTorch Group module.
    """
    B, N, C = xyz.shape
    assert C == 6, "module requires xyz + normal input (B, N, 6)"
    G, M = num_group, group_size

    # Channel-major xyz (B, 3, N) so N maps onto the 128-lane axis inside the kernel.
    xyz_t3 = jnp.transpose(xyz[:, :, :3], (0, 2, 1))

    out_shapes = (
        jax.ShapeDtypeStruct((B, 3, M * G), jnp.float32),   # neighborhood xyz (channel-major, flat)
        jax.ShapeDtypeStruct((B, 3, M * G), jnp.float32),   # neighborhood normals
        jax.ShapeDtypeStruct((B, 3, G), jnp.float32),       # centers (channel-major)
    )

    grid_spec = pltpu.PrefetchScalarGridSpec(
        num_scalar_prefetch=1,                              # start_idx lands in SMEM
        grid=(B,),
        in_specs=[
            pl.BlockSpec((None, N, C), lambda b, s: (b, 0, 0)),   # (N, 6) per-batch block
            pl.BlockSpec((None, 3, N), lambda b, s: (b, 0, 0)),   # (3, N) per-batch block
        ],
        out_specs=[
            pl.BlockSpec((None, 3, M * G), lambda b, s: (b, 0, 0)),
            pl.BlockSpec((None, 3, M * G), lambda b, s: (b, 0, 0)),
            pl.BlockSpec((None, 3, G), lambda b, s: (b, 0, 0)),
        ],
        scratch_shapes=[
            pltpu.VMEM((G, 3), jnp.float32),        # FPS centers
            pltpu.VMEM((M * G, N), jnp.float32),    # one-hot selection matrix
        ],
    )

    kernel = functools.partial(_group_kernel, G, M)

    nb_raw, nn_raw, c_raw = pl.pallas_call(
        kernel,
        out_shape=out_shapes,
        grid_spec=grid_spec,
        compiler_params=pltpu.CompilerParams(
            dimension_semantics=("parallel",),              # batches independent -> shard over TCs
            vmem_limit_bytes=48 * 1024 * 1024,
        ),
    )(start_idx, xyz, xyz_t3)

    # Layout plumbing back to the PyTorch module's output shapes (outside the kernel).
    nb = jnp.transpose(nb_raw.reshape(B, 3, M, G), (0, 3, 2, 1))   # (B, G, M, 3)
    nn = jnp.transpose(nn_raw.reshape(B, 3, M, G), (0, 3, 2, 1))   # (B, G, M, 3)
    center = jnp.transpose(c_raw, (0, 2, 1))                       # (B, G, 3)
    return nb, nn, center


if __name__ == "__main__":
    key = jax.random.PRNGKey(0)
    k_pts, k_start = jax.random.split(key)

    B, N = 2, 64
    num_group, group_size = 8, 8

    xyz = jax.random.normal(k_pts, (B, N, 6), dtype=jnp.float32)
    # Deterministic substitute for sample_farthest_points(random_start_point=True).
    start_idx = jax.random.randint(k_start, (B,), 0, N, dtype=jnp.int32)

    fwd = jax.jit(group_forward, static_argnums=(1, 2))
    neigh_xyz, neigh_nrm, center = fwd(xyz, num_group, group_size, start_idx)
    jax.block_until_ready((neigh_xyz, neigh_nrm, center))

    assert neigh_xyz.shape == (B, num_group, group_size, 3)
    assert neigh_nrm.shape == (B, num_group, group_size, 3)
    assert center.shape == (B, num_group, 3)
    assert bool(jnp.all(jnp.isfinite(neigh_xyz)))
    assert bool(jnp.all(jnp.isfinite(neigh_nrm)))
    assert bool(jnp.all(jnp.isfinite(center)))
    print("KERNEL_OK")
</pallas_src>

<mosaic_0001>
module attributes {stable_mosaic.version = 11 : i64} {
  func.func @_group_kernel(%arg0: i32, %arg1: memref<2xi32, #tpu.memory_space<smem>>, %arg2: memref<1x64x6xf32, #tpu.memory_space<vmem>>, %arg3: memref<1x3x64xf32, #tpu.memory_space<vmem>>, %arg4: memref<1x3x64xf32, #tpu.memory_space<vmem>>, %arg5: memref<1x3x64xf32, #tpu.memory_space<vmem>>, %arg6: memref<1x3x8xf32, #tpu.memory_space<vmem>>, %arg7: memref<8x3xf32, #tpu.memory_space<vmem>>, %arg8: memref<64x64xf32, #tpu.memory_space<vmem>>) attributes {dimension_semantics = [#tpu.dimension_semantics<parallel>], iteration_bounds = array<i64: 2>, scalar_prefetch = 1 : i64, scratch_operands = 2 : i64, tpu.core_type = #tpu.core_type<tc>, window_params = [{transform_indices = @transform_0, window_bounds = array<i64: 1, 64, 6>}, {transform_indices = @transform_1, window_bounds = array<i64: 1, 3, 64>}, {transform_indices = @transform_2, window_bounds = array<i64: 1, 3, 64>}, {transform_indices = @transform_3, window_bounds = array<i64: 1, 3, 64>}, {transform_indices = @transform_4, window_bounds = array<i64: 1, 3, 8>}]} {
    %c0 = arith.constant 0 : index
    %c0_0 = arith.constant 0 : index
    %c0_1 = arith.constant 0 : index
    %0 = vector.load %arg2[%c0, %c0_0, %c0_1] : memref<1x64x6xf32, #tpu.memory_space<vmem>>, vector<1x64x6xf32>
    %1 = vector.shape_cast %0 : vector<1x64x6xf32> to vector<64x6xf32>
    %c0_2 = arith.constant 0 : index
    %c0_3 = arith.constant 0 : index
    %c0_4 = arith.constant 0 : index
    %2 = vector.load %arg3[%c0_2, %c0_3, %c0_4] : memref<1x3x64xf32, #tpu.memory_space<vmem>>, vector<1x3x64xf32>
    %3 = vector.shape_cast %2 : vector<1x3x64xf32> to vector<3x64xf32>
    %4 = vector.extract_strided_slice %3 {offsets = [0, 0], sizes = [1, 64], strides = [1, 1]} : vector<3x64xf32> to vector<1x64xf32>
    %5 = vector.extract_strided_slice %3 {offsets = [1, 0], sizes = [1, 64], strides = [1, 1]} : vector<3x64xf32> to vector<1x64xf32>
    %6 = vector.extract_strided_slice %3 {offsets = [2, 0], sizes = [1, 64], strides = [1, 1]} : vector<3x64xf32> to vector<1x64xf32>
    %7 = tpu.iota {dimensions = array<i32: 1>} : vector<1x64xi32>
    %8 = arith.index_cast %arg0 : i32 to index
    %9 = memref.load %arg1[%8] : memref<2xi32, #tpu.memory_space<smem>>
    %cst = arith.constant 1.000000e+30 : f32
    %10 = vector.broadcast %cst : f32 to vector<1x64xf32>
    %c0_i32 = arith.constant 0 : i32
    %c8_i32 = arith.constant 8 : i32
    %11 = arith.addi %c0_i32, %c8_i32 : i32
    %c1_i32 = arith.constant 1 : i32
    %12:2 = scf.for %arg9 = %c0_i32 to %11 step %c1_i32 iter_args(%arg10 = %10, %arg11 = %9) -> (vector<1x64xf32>, i32)  : i32 {
      %c0_27 = arith.constant 0 : index
      %49 = arith.index_cast %arg11 : i32 to index
      %c0_28 = arith.constant 0 : index
      %50 = vector.load %arg2[%c0_27, %49, %c0_28] : memref<1x64x6xf32, #tpu.memory_space<vmem>>, vector<1x1x6xf32>
      %51 = vector.shape_cast %50 : vector<1x1x6xf32> to vector<1x6xf32>
      %52 = vector.extract_strided_slice %51 {offsets = [0, 0], sizes = [1, 3], strides = [1, 1]} : vector<1x6xf32> to vector<1x3xf32>
      %53 = arith.index_cast %arg9 : i32 to index
      %c0_29 = arith.constant 0 : index
      %54 = vector.load %arg7[%53, %c0_29] : memref<8x3xf32, #tpu.memory_space<vmem>>, vector<1x3xf32>
      tpu.vector_store %arg7[%53, %c0_29], %52 {strides = array<i32>} : memref<8x3xf32, #tpu.memory_space<vmem>>, vector<1x3xf32>,
      %55 = vector.extract_strided_slice %51 {offsets = [0, 0], sizes = [1, 1], strides = [1, 1]} : vector<1x6xf32> to vector<1x1xf32>
      %56 = vector.shape_cast %55 : vector<1x1xf32> to vector<1x1x1xf32>
      %cst_30 = arith.constant dense<0.000000e+00> : vector<1xf32>
      %57 = vector.multi_reduction <add>, %56, %cst_30 [1, 2] : vector<1x1x1xf32> to vector<1xf32>
      %58 = vector.shape_cast %57 : vector<1xf32> to vector<1x1x1xf32>
      %59 = vector.extract %58[0, 0, 0] : f32 from vector<1x1x1xf32>
      %60 = vector.extract_strided_slice %51 {offsets = [0, 1], sizes = [1, 1], strides = [1, 1]} : vector<1x6xf32> to vector<1x1xf32>
      %61 = vector.shape_cast %60 : vector<1x1xf32> to vector<1x1x1xf32>
      %cst_31 = arith.constant dense<0.000000e+00> : vector<1xf32>
      %62 = vector.multi_reduction <add>, %61, %cst_31 [1, 2] : vector<1x1x1xf32> to vector<1xf32>
      %63 = vector.shape_cast %62 : vector<1xf32> to vector<1x1x1xf32>
      %64 = vector.extract %63[0, 0, 0] : f32 from vector<1x1x1xf32>
      %65 = vector.extract_strided_slice %51 {offsets = [0, 2], sizes = [1, 1], strides = [1, 1]} : vector<1x6xf32> to vector<1x1xf32>
      %66 = vector.shape_cast %65 : vector<1x1xf32> to vector<1x1x1xf32>
      %cst_32 = arith.constant dense<0.000000e+00> : vector<1xf32>
      %67 = vector.multi_reduction <add>, %66, %cst_32 [1, 2] : vector<1x1x1xf32> to vector<1xf32>
      %68 = vector.shape_cast %67 : vector<1xf32> to vector<1x1x1xf32>
      %69 = vector.extract %68[0, 0, 0] : f32 from vector<1x1x1xf32>
      %70 = vector.broadcast %59 : f32 to vector<1x64xf32>
      %71 = arith.subf %4, %70 : vector<1x64xf32>
      %72 = arith.mulf %71, %71 : vector<1x64xf32>
      %73 = vector.broadcast %64 : f32 to vector<1x64xf32>
      %74 = arith.subf %5, %73 : vector<1x64xf32>
      %75 = arith.mulf %74, %74 : vector<1x64xf32>
      %76 = arith.addf %72, %75 : vector<1x64xf32>
      %77 = vector.broadcast %69 : f32 to vector<1x64xf32>
      %78 = arith.subf %6, %77 : vector<1x64xf32>
      %79 = arith.mulf %78, %78 : vector<1x64xf32>
      %80 = arith.addf %76, %79 : vector<1x64xf32>
      %81 = arith.minimumf %arg10, %80 : vector<1x64xf32>
      %82 = vector.shape_cast %81 : vector<1x64xf32> to vector<1x1x64xf32>
      %cst_33 = arith.constant dense<0xFF800000> : vector<1xf32>
      %83 = vector.multi_reduction <maximumf>, %82, %cst_33 [1, 2] : vector<1x1x64xf32> to vector<1xf32>
      %84 = vector.shape_cast %83 : vector<1xf32> to vector<1x1x1xf32>
      %85 = vector.extract %84[0, 0, 0] : f32 from vector<1x1x1xf32>
      %86 = vector.broadcast %85 : f32 to vector<1x64xf32>
      %87 = arith.cmpf oeq, %81, %86 : vector<1x64xf32>
      %c64_i32 = arith.constant 64 : i32
      %88 = vector.broadcast %c64_i32 : i32 to vector<1x64xi32>
      %89 = arith.select %87, %7, %88 : vector<1x64xi1>, vector<1x64xi32>
      %90 = vector.shape_cast %89 : vector<1x64xi32> to vector<1x1x64xi32>
      %cst_34 = arith.constant dense<2147483647> : vector<1xi32>
      %91 = vector.multi_reduction <minsi>, %90, %cst_34 [1, 2] : vector<1x1x64xi32> to vector<1xi32>
      %92 = vector.shape_cast %91 : vector<1xi32> to vector<1x1x1xi32>
      %93 = vector.extract %92[0, 0, 0] : i32 from vector<1x1x1xi32>
      scf.yield %81, %93 : vector<1x64xf32>, i32
    }
    %c8_i32_5 = arith.constant 8 : i32
    %c0_6 = arith.constant 0 : index
    %c0_7 = arith.constant 0 : index
    %13 = vector.load %arg7[%c0_6, %c0_7] : memref<8x3xf32, #tpu.memory_space<vmem>>, vector<8x3xf32>
    %14 = arith.mulf %13, %13 : vector<8x3xf32>
    %cst_8 = arith.constant dense<0.000000e+00> : vector<8xf32>
    %15 = vector.multi_reduction <add>, %14, %cst_8 [1] : vector<8x3xf32> to vector<8xf32>
    %16 = vector.shape_cast %15 : vector<8xf32> to vector<8x1xf32>
    %17 = arith.mulf %4, %4 : vector<1x64xf32>
    %18 = arith.mulf %5, %5 : vector<1x64xf32>
    %19 = arith.addf %17, %18 : vector<1x64xf32>
    %20 = arith.mulf %6, %6 : vector<1x64xf32>
    %21 = arith.addf %19, %20 : vector<1x64xf32>
    %cst_9 = arith.constant dense<0.000000e+00> : vector<8x64xf32>
    %22 = tpu.matmul %13, %3, %cst_9 {dimension_numbers = #tpu.dot_dimension_numbers<[1], [0], [0], [1], [0, 0, 1, 1], [], []>} : vector<8x3xf32>, vector<3x64xf32>, vector<8x64xf32> -> vector<8x64xf32>
    %23 = vector.broadcast %16 : vector<8x1xf32> to vector<8x64xf32>
    %24 = vector.broadcast %21 : vector<1x64xf32> to vector<8x64xf32>
    %25 = arith.addf %23, %24 : vector<8x64xf32>
    %cst_10 = arith.constant 2.000000e+00 : f32
    %26 = vector.broadcast %cst_10 : f32 to vector<8x64xf32>
    %27 = arith.mulf %26, %22 : vector<8x64xf32>
    %28 = arith.subf %25, %27 : vector<8x64xf32>
    %29 = tpu.iota {dimensions = array<i32: 1>} : vector<8x64xi32>
    %c0_i32_11 = arith.constant 0 : i32
    %c8_i32_12 = arith.constant 8 : i32
    %30 = arith.addi %c0_i32_11, %c8_i32_12 : i32
    %c1_i32_13 = arith.constant 1 : i32
    %31 = scf.for %arg9 = %c0_i32_11 to %30 step %c1_i32_13 iter_args(%arg10 = %28) -> (vector<8x64xf32>)  : i32 {
      %cst_27 = arith.constant dense<0x7F800000> : vector<8xf32>
      %49 = vector.multi_reduction <minimumf>, %arg10, %cst_27 [1] : vector<8x64xf32> to vector<8xf32>
      %50 = vector.shape_cast %49 : vector<8xf32> to vector<8x1xf32>
      %51 = vector.broadcast %50 : vector<8x1xf32> to vector<8x64xf32>
      %52 = arith.cmpf oeq, %arg10, %51 : vector<8x64xf32>
      %c64_i32 = arith.constant 64 : i32
      %53 = vector.broadcast %c64_i32 : i32 to vector<8x64xi32>
      %54 = arith.select %52, %29, %53 : vector<8x64xi1>, vector<8x64xi32>
      %cst_28 = arith.constant dense<2147483647> : vector<8xi32>
      %55 = vector.multi_reduction <minsi>, %54, %cst_28 [1] : vector<8x64xi32> to vector<8xi32>
      %56 = vector.shape_cast %55 : vector<8xi32> to vector<8x1xi32>
      %57 = vector.broadcast %56 : vector<8x1xi32> to vector<8x64xi32>
      %58 = arith.cmpi eq, %29, %57 : vector<8x64xi32>
      %c8_i32_29 = arith.constant 8 : i32
      %59 = arith.muli %arg9, %c8_i32_29 : i32
      %60 = tpu.assume_multiple %59, 8 : i32
      %61 = arith.extui %58 : vector<8x64xi1> to vector<8x64xi32>
      %62 = arith.sitofp %61 : vector<8x64xi32> to vector<8x64xf32>
      %63 = arith.index_cast %60 : i32 to index
      %c0_30 = arith.constant 0 : index
      %64 = vector.load %arg8[%63, %c0_30] : memref<64x64xf32, #tpu.memory_space<vmem>>, vector<8x64xf32>
      tpu.vector_store %arg8[%63, %c0_30], %62 {strides = array<i32>} : memref<64x64xf32, #tpu.memory_space<vmem>>, vector<8x64xf32>,
      %cst_31 = arith.constant 1.000000e+30 : f32
      %65 = vector.broadcast %cst_31 : f32 to vector<8x64xf32>
      %66 = arith.select %58, %65, %arg10 : vector<8x64xi1>, vector<8x64xf32>
      scf.yield %66 : vector<8x64xf32>
    }
    %c8_i32_14 = arith.constant 8 : i32
    %c0_15 = arith.constant 0 : index
    %c0_16 = arith.constant 0 : index
    %32 = vector.load %arg8[%c0_15, %c0_16] : memref<64x64xf32, #tpu.memory_space<vmem>>, vector<64x64xf32>
    %cst_17 = arith.constant dense<0.000000e+00> : vector<64x6xf32>
    %33 = tpu.matmul %32, %1, %cst_17 {dimension_numbers = #tpu.dot_dimension_numbers<[1], [0], [0], [1], [0, 0, 1, 1], [], []>} : vector<64x64xf32>, vector<64x6xf32>, vector<64x6xf32> -> vector<64x6xf32>
    %34 = tpu.transpose %33, [1, 0] : vector<64x6xf32> -> vector<6x64xf32>
    %35 = tpu.transpose %13, [1, 0] : vector<8x3xf32> -> vector<3x8xf32>
    %c0_18 = arith.constant 0 : index
    %c0_19 = arith.constant 0 : index
    %c0_20 = arith.constant 0 : index
    %36 = vector.load %arg6[%c0_18, %c0_19, %c0_20] : memref<1x3x8xf32, #tpu.memory_space<vmem>>, vector<1x3x8xf32>
    %37 = vector.shape_cast %36 : vector<1x3x8xf32> to vector<3x8xf32>
    %38 = vector.shape_cast %35 : vector<3x8xf32> to vector<1x3x8xf32>
    tpu.vector_store %arg6[%c0_18, %c0_19, %c0_20], %38 {strides = array<i32>} : memref<1x3x8xf32, #tpu.memory_space<vmem>>, vector<1x3x8xf32>,
    %39 = tpu.concatenate %35, %35, %35, %35, %35, %35, %35, %35 in 1 : vector<3x8xf32>, vector<3x8xf32>, vector<3x8xf32>, vector<3x8xf32>, vector<3x8xf32>, vector<3x8xf32>, vector<3x8xf32>, vector<3x8xf32> -> vector<3x64xf32>
    %40 = vector.extract_strided_slice %34 {offsets = [0, 0], sizes = [3, 64], strides = [1, 1]} : vector<6x64xf32> to vector<3x64xf32>
    %41 = arith.subf %40, %39 : vector<3x64xf32>
    %c0_21 = arith.constant 0 : index
    %c0_22 = arith.constant 0 : index
    %c0_23 = arith.constant 0 : index
    %42 = vector.load %arg4[%c0_21, %c0_22, %c0_23] : memref<1x3x64xf32, #tpu.memory_space<vmem>>, vector<1x3x64xf32>
    %43 = vector.shape_cast %42 : vector<1x3x64xf32> to vector<3x64xf32>
    %44 = vector.shape_cast %41 : vector<3x64xf32> to vector<1x3x64xf32>
    tpu.vector_store %arg4[%c0_21, %c0_22, %c0_23], %44 {strides = array<i32>} : memref<1x3x64xf32, #tpu.memory_space<vmem>>, vector<1x3x64xf32>,
    %45 = vector.extract_strided_slice %34 {offsets = [3, 0], sizes = [3, 64], strides = [1, 1]} : vector<6x64xf32> to vector<3x64xf32>
    %c0_24 = arith.constant 0 : index
    %c0_25 = arith.constant 0 : index
    %c0_26 = arith.constant 0 : index
    %46 = vector.load %arg5[%c0_24, %c0_25, %c0_26] : memref<1x3x64xf32, #tpu.memory_space<vmem>>, vector<1x3x64xf32>
    %47 = vector.shape_cast %46 : vector<1x3x64xf32> to vector<3x64xf32>
    %48 = vector.shape_cast %45 : vector<3x64xf32> to vector<1x3x64xf32>
    tpu.vector_store %arg5[%c0_24, %c0_25, %c0_26], %48 {strides = array<i32>} : memref<1x3x64xf32, #tpu.memory_space<vmem>>, vector<1x3x64xf32>,
    return
  }
  func.func @transform_0(%arg0: i32, %arg1: memref<2xi32, #tpu.memory_space<smem>>) -> (i32, i32, i32) {
    %c0_i32 = arith.constant 0 : i32
    %c0_i32_0 = arith.constant 0 : i32
    %c0_i32_1 = arith.constant 0 : i32
    return %arg0, %c0_i32, %c0_i32_0 : i32, i32, i32
  }
  func.func @transform_1(%arg0: i32, %arg1: memref<2xi32, #tpu.memory_space<smem>>) -> (i32, i32, i32) {
    %c0_i32 = arith.constant 0 : i32
    %c0_i32_0 = arith.constant 0 : i32
    %c0_i32_1 = arith.constant 0 : i32
    return %arg0, %c0_i32, %c0_i32_0 : i32, i32, i32
  }
  func.func @transform_2(%arg0: i32, %arg1: memref<2xi32, #tpu.memory_space<smem>>) -> (i32, i32, i32) {
    %c0_i32 = arith.constant 0 : i32
    %c0_i32_0 = arith.constant 0 : i32
    %c0_i32_1 = arith.constant 0 : i32
    return %arg0, %c0_i32, %c0_i32_0 : i32, i32, i32
  }
  func.func @transform_3(%arg0: i32, %arg1: memref<2xi32, #tpu.memory_space<smem>>) -> (i32, i32, i32) {
    %c0_i32 = arith.constant 0 : i32
    %c0_i32_0 = arith.constant 0 : i32
    %c0_i32_1 = arith.constant 0 : i32
    return %arg0, %c0_i32, %c0_i32_0 : i32, i32, i32
  }
  func.func @transform_4(%arg0: i32, %arg1: memref<2xi32, #tpu.memory_space<smem>>) -> (i32, i32, i32) {
    %c0_i32 = arith.constant 0 : i32
    %c0_i32_0 = arith.constant 0 : i32
    %c0_i32_1 = arith.constant 0 : i32
    return %arg0, %c0_i32, %c0_i32_0 : i32, i32, i32
  }
}

</mosaic_0001>

<llo_original>
// kernel: group_forward.1
$region0: #{group_forward.1}
  #allocation0 [shape = 'u32[]', space=smem, size = 0x4, offset = 0x4, fixed_abs, tag = 'smem constant byte address 0x4 - core index']
  #allocation1 [shape = 'u32[72,128]{1,0:T(1,128)}', space=vmem, size = 0x9000, scoped, tag = 'internal scratch']
  #allocation2 [shape = 'f32[8,3]{1,0:T(8,128)}', space=vmem, size = 0x1000, scoped, tag = 'scratch operand']
  #allocation3 [shape = 'f32[64,64]{1,0:T(8,128)}', space=vmem, size = 0x8000, scoped, tag = 'scratch operand']
  #allocation4 [shape = 's32[1]{0}', space=sflag, size = 0x4, scoped, tag = 'scoped memory for group_forward.1']
  #allocation5 [shape = 'u8[512]{0}', space=smem, size = 0x200, scoped, tag = 'prefetched SMEM operand 0']
  %s0 = inlined_call_operand.vmem [shape: s32[2], index: 0, kind: input, shape index: {}]
  %s1 = inlined_call_operand.vmem [shape: f32[2,64,6], index: 1, kind: input, shape index: {}]
  %s2 = inlined_call_operand.vmem [shape: f32[2,3,64], index: 2, kind: input, shape index: {}]
  %s3 = inlined_call_operand.vmem [shape: f32[2,3,64], index: 3, kind: output, shape index: {0}]
  %s4 = inlined_call_operand.vmem [shape: f32[2,3,64], index: 4, kind: output, shape index: {1}]
  %s5 = inlined_call_operand.vmem [shape: f32[2,3,8], index: 5, kind: output, shape index: {2}]
  %6 = xla_tuple %s3, %s4, %s5
  %s7 = sld [smem:[#allocation0]]
  $region71: #{group_forward.1} parent=0
    _
  %s9 = ssub.s32 1, %s7
  %s10 = scalar_select 0, %s9, %s7
  %s12 = sshll.u32 %s0, 4
  %s13 = int_to_ptr.vmem [resolvable:$true] %s12
  %15 = dma.vmem_to_smem %s13, 16, [#allocation5], [#allocation4]
  %17 = dma.done [#allocation4], 16
  %18 = sfence
  loop: start=0, step=1, limit=4
  $region2: #{group_forward.1} parent=0 // loop_pre_header
    _
  $region3: #{group_forward.1} parent=0 // loop_header
    %s20 = sphi 0, %s24
    %p21 = scmp.ge.s32.totalorder %s20, 4
    %s30 = sphi 0, %s32
    %s33 = sphi 0, %s30
    %s34 = sphi 0, %s33
    %s50 = sphi 0, %s34
    %s56 = sphi 0, %s58
    %s59 = sphi 0, %s56
    %s60 = sphi 0, %s59
    %s76 = sphi 0, %s60
    %s82 = sphi 0, %s84
    %s85 = sphi 0, %s82
    %s86 = sphi 0, %s85
    %s102 = sphi 0, %s86
    %s108 = sphi 0, %s110
    %s111 = sphi 0, %s108
    %s112 = sphi 0, %s111
    %s128 = sphi 0, %s112
    %s134 = sphi 0, %s136
    %s137 = sphi 0, %s134
    %s138 = sphi 0, %s137
    %s154 = sphi 0, %s138
  $region4: #{group_forward.1} parent=0 // loop_header_branch
    %23 = sbr.rel (%p21) target = $region8
  $region5: #{group_forward.1} parent=0 // loop_body
    %s25 = ssub.s32 %s20, 1
    %s26 = ssub.s32 %s20, 2
    %s27 = sadd.s32 %s20, 1
    %s28 = ssub.s32 %s20, %s27
    %p29 = scmp.eq.s32.totalorder %s28, 0
    %s31 = sadd.s32 %s30, 1
    %s32 = scalar_select %p29, %s30, %s31
    %p35 = pneg %p29
    %p36 = scmp.eq.s32.totalorder %s20, 1
    %p37 = por %p35, %p36
    %p38 = scmp.ne.s32.totalorder %s30, %s33
    %p39 = scmp.eq.s32.totalorder %s20, 0
    %p40 = por %p38, %p39
    %p41 = scmp.ne.s32.totalorder %s30, %s33
    %p42 = scmp.eq.s32.totalorder %s25, 1
    %p43 = por %p41, %p42
    %p44 = scmp.ne.s32.totalorder %s33, %s34
    %p45 = scmp.eq.s32.totalorder %s25, 0
    %p46 = por %p44, %p45
    %p47 = scmp.ne.s32.totalorder %s33, %s34
    %p48 = scmp.eq.s32.totalorder %s26, 1
    %p49 = por %p47, %p48
    %p51 = scmp.ne.s32.totalorder %s34, %s50
    %p52 = scmp.eq.s32.totalorder %s26, 0
    %p53 = por %p51, %p52
    %s54 = ssub.s32 %s20, %s27
    %p55 = scmp.eq.s32.totalorder %s54, 0
    %s57 = sadd.s32 %s56, 1
    %s58 = scalar_select %p55, %s56, %s57
    %p61 = pneg %p55
    %p62 = scmp.eq.s32.totalorder %s20, 1
    %p63 = por %p61, %p62
    %p64 = scmp.ne.s32.totalorder %s56, %s59
    %p65 = scmp.eq.s32.totalorder %s20, 0
    %p66 = por %p64, %p65
    %p67 = scmp.ne.s32.totalorder %s56, %s59
    %p68 = scmp.eq.s32.totalorder %s25, 1
    %p69 = por %p67, %p68
    %p70 = scmp.ne.s32.totalorder %s59, %s60
    %p71 = scmp.eq.s32.totalorder %s25, 0
    %p72 = por %p70, %p71
    %p73 = scmp.ne.s32.totalorder %s59, %s60
    %p74 = scmp.eq.s32.totalorder %s26, 1
    %p75 = por %p73, %p74
    %p77 = scmp.ne.s32.totalorder %s60, %s76
    %p78 = scmp.eq.s32.totalorder %s26, 0
    %p79 = por %p77, %p78
    %s80 = ssub.s32 %s20, %s27
    %p81 = scmp.eq.s32.totalorder %s80, 0
    %s83 = sadd.s32 %s82, 1
    %s84 = scalar_select %p81, %s82, %s83
    %p87 = pneg %p81
    %p88 = scmp.eq.s32.totalorder %s20, 1
    %p89 = por %p87, %p88
    %p90 = scmp.ne.s32.totalorder %s82, %s85
    %p91 = scmp.eq.s32.totalorder %s20, 0
    %p92 = por %p90, %p91
    %p93 = scmp.ne.s32.totalorder %s82, %s85
    %p94 = scmp.eq.s32.totalorder %s25, 1
    %p95 = por %p93, %p94
    %p96 = scmp.ne.s32.totalorder %s85, %s86
    %p97 = scmp.eq.s32.totalorder %s25, 0
    %p98 = por %p96, %p97
    %p99 = scmp.ne.s32.totalorder %s85, %s86
    %p100 = scmp.eq.s32.totalorder %s26, 1
    %p101 = por %p99, %p100
    %p103 = scmp.ne.s32.totalorder %s86, %s102
    %p104 = scmp.eq.s32.totalorder %s26, 0
    %p105 = por %p103, %p104
    %s106 = ssub.s32 %s20, %s27
    %p107 = scmp.eq.s32.totalorder %s106, 0
    %s109 = sadd.s32 %s108, 1
    %s110 = scalar_select %p107, %s108, %s109
    %p113 = pneg %p107
    %p114 = scmp.eq.s32.totalorder %s20, 1
    %p115 = por %p113, %p114
    %p116 = scmp.ne.s32.totalorder %s108, %s111
    %p117 = scmp.eq.s32.totalorder %s20, 0
    %p118 = por %p116, %p117
    %p119 = scmp.ne.s32.totalorder %s108, %s111
    %p120 = scmp.eq.s32.totalorder %s25, 1
    %p121 = por %p119, %p120
    %p122 = scmp.ne.s32.totalorder %s111, %s112
    %p123 = scmp.eq.s32.totalorder %s25, 0
    %p124 = por %p122, %p123
    %p125 = scmp.ne.s32.totalorder %s111, %s112
    %p126 = scmp.eq.s32.totalorder %s26, 1
    %p127 = por %p125, %p126
    %p129 = scmp.ne.s32.totalorder %s112, %s128
    %p130 = scmp.eq.s32.totalorder %s26, 0
    %p131 = por %p129, %p130
    %s132 = ssub.s32 %s20, %s27
    %p133 = scmp.eq.s32.totalorder %s132, 0
    %s135 = sadd.s32 %s134, 1
    %s136 = scalar_select %p133, %s134, %s135
    %p139 = pneg %p133
    %p140 = scmp.eq.s32.totalorder %s20, 1
    %p141 = por %p139, %p140
    %p142 = scmp.ne.s32.totalorder %s134, %s137
    %p143 = scmp.eq.s32.totalorder %s20, 0
    %p144 = por %p142, %p143
    %p145 = scmp.ne.s32.totalorder %s134, %s137
    %p146 = scmp.eq.s32.totalorder %s25, 1
    %p147 = por %p145, %p146
    %p148 = scmp.ne.s32.totalorder %s137, %s138
    %p149 = scmp.eq.s32.totalorder %s25, 0
    %p150 = por %p148, %p149
    %p151 = scmp.ne.s32.totalorder %s137, %s138
    %p152 = scmp.eq.s32.totalorder %s26, 1
    %p153 = por %p151, %p152
    %p155 = scmp.ne.s32.totalorder %s138, %s154
    %p156 = scmp.eq.s32.totalorder %s26, 0
    %p157 = por %p155, %p156
    %p158 = scmp.le.s32.totalorder 1, %s20
    %p159 = scmp.lt.s32.totalorder %s20, 3
    %p160 = pnand %p158, %p159
    %p161 = pneg %p160
    // Predicated region
    $region9: #{group_forward.1} parent=5 // pred_check
      _
    $region10: #{group_forward.1} parent=5 // pred_check_branch
      %163 = sbr.rel (%p160) target = $region12
    $region11: #{group_forward.1} parent=5 // pred_region
      %s164 = ssub.s32 %s20, 1
    $region12: #{group_forward.1} parent=5 // pred_fallthru
      _
    %p165 = scmp.lt.s32.totalorder %s20, 2
    // Predicated region
    $region13: #{group_forward.1} parent=5 // pred_check
      %p166 = pneg %p165
    $region14: #{group_forward.1} parent=5 // pred_check_branch
      %168 = sbr.rel (%p166) target = $region16
    $region15: #{group_forward.1} parent=5 // pred_region
      // Predicated region
      $region17: #{group_forward.1} parent=15 // pred_check
        %p169 = pneg %p40
      $region18: #{group_forward.1} parent=15 // pred_check_branch
        %171 = sbr.rel (%p169) target = $region20
      $region19: #{group_forward.1} parent=15 // pred_region
        %p172 = scmp.lt.s32.totalorder %s20, 1
        %s173 = scalar_select %p172, %s20, 1
        %s174 = smul.addr %s173, 8
        %s175 = smul.addr %s174, 8
        %s176 = scalar_lea.vmem %s1, %s175
      $region20: #{group_forward.1} parent=15 // pred_fallthru
        _
      // Predicated region
      $region21: #{group_forward.1} parent=15 // pred_check
        %p177 = pneg %p66
      $region22: #{group_forward.1} parent=15 // pred_check_branch
        %179 = sbr.rel (%p177) target = $region24
      $region23: #{group_forward.1} parent=15 // pred_region
        %p180 = scmp.lt.s32.totalorder %s20, 1
        %s181 = scalar_select %p180, %s20, 1
        %s182 = smul.addr %s181, 4
        %s183 = scalar_lea.vmem %s2, %s182
      $region24: #{group_forward.1} parent=15 // pred_fallthru
        _
    $region16: #{group_forward.1} parent=5 // pred_fallthru
      _
    %p184 = scmp.le.s32.totalorder 1, %s20
    %p185 = scmp.lt.s32.totalorder %s20, 3
    %p186 = pnand %p184, %p185
    %p187 = pneg %p186
    // Predicated region
    $region25: #{group_forward.1} parent=5 // pred_check
      _
    $region26: #{group_forward.1} parent=5 // pred_check_branch
      %189 = sbr.rel (%p186) target = $region28
    $region27: #{group_forward.1} parent=5 // pred_region
      %s190 = ssub.s32 %s20, 1
      %p191 = scmp.lt.s32.totalorder %s25, 1
      %s192 = scalar_select %p191, %s25, 1
      %s193 = smul.addr %s192, 8
      %s194 = smul.addr %s193, 8
      %s195 = scalar_lea.vmem %s1, %s194
      %p196 = pneg %p46
      %p197 = pneg %p43
      %p198 = scmp.lt.s32.totalorder %s25, 1
      %s199 = scalar_select %p198, %s25, 1
      %s200 = smul.addr %s199, 4
      %s201 = scalar_lea.vmem %s2, %s200
      %p202 = pneg %p72
      %p203 = pneg %p69
      %p204 = pneg %p98
      %p205 = pneg %p95
      %p206 = scmp.lt.s32.totalorder %s25, 1
      %s207 = scalar_select %p206, %s25, 1
      %s208 = smul.addr %s207, 4
      %s209 = scalar_lea.vmem %s3, %s208
      %p210 = pneg %p124
      %p211 = pneg %p121
      %p212 = scmp.lt.s32.totalorder %s25, 1
      %s213 = scalar_select %p212, %s25, 1
      %s214 = smul.addr %s213, 4
      %s215 = scalar_lea.vmem %s4, %s214
      %p216 = pneg %p150
      %p217 = pneg %p147
      %p218 = scmp.lt.s32.totalorder %s25, 1
      %s219 = scalar_select %p218, %s25, 1
      %s220 = smul.addr %s219, 4
      %s221 = scalar_lea.vmem %s5, %s220
      %p222 = scmp.lt.s32.totalorder %s25, 1
      %s223 = scalar_select %p222, %s25, 1
      %s224 = smul.addr %s223, 8
      %s225 = smul.addr %s224, 8
      %s226 = scalar_lea.vmem %s1, %s225
      %p227 = scmp.lt.s32.totalorder %s25, 1
      %s228 = scalar_select %p227, %s25, 1
      %s229 = smul.addr %s228, 4
      %s230 = scalar_lea.vmem %s2, %s229
      %p231 = scmp.lt.s32.totalorder %s25, 1
      %s232 = scalar_select %p231, %s25, 1
      %s233 = smul.addr %s232, 4
      %s234 = scalar_lea.vmem %s3, %s233
      %p235 = scmp.lt.s32.totalorder %s25, 1
      %s236 = scalar_select %p235, %s25, 1
      %s237 = smul.addr %s236, 4
      %s238 = scalar_lea.vmem %s4, %s237
      %p239 = scmp.lt.s32.totalorder %s25, 1
      %s240 = scalar_select %p239, %s25, 1
      %s241 = smul.addr %s240, 4
      %s242 = scalar_lea.vmem %s5, %s241
      %v243 = vld [vmem:[%s226] sm:$0xff]
      %v244 = vld [vmem:[%s226 + $0x8] sm:$0xff]
      %v245 = vld [vmem:[%s226 + $0x10] sm:$0xff]
      %v246 = vld [vmem:[%s226 + $0x18] sm:$0xff]
      %v247 = vld [vmem:[%s226 + $0x20] sm:$0xff]
      %v248 = vld [vmem:[%s226 + $0x28] sm:$0xff]
      %v249 = vld [vmem:[%s226 + $0x30] sm:$0xff]
      %v250 = vld [vmem:[%s226 + $0x38] sm:$0xff]
      %v251 = vld [vmem:[%s230] sm:$0x7]
      %v252 = vlaneseq
      %v253 = vand.u32 %v252, 127
      %s254 = sld [smem:[#allocation5 + %s25]]
      loop: start=0, step=1, limit=8
      $region29: #{group_forward.1} parent=27 // loop_pre_header
        _
      $region30: #{group_forward.1} parent=27 // loop_header
        %s256 = sphi 0, %s260
        %p257 = scmp.ge.s32.totalorder %s256, 8
        %v261 = vphi 1e+30, %v296
        %s262 = sphi %s254, %s335
      $region31: #{group_forward.1} parent=27 // loop_header_branch
        %259 = sbr.rel (%p257) target = $region35
      $region32: #{group_forward.1} parent=27 // loop_body
        %s263 = scalar_lea.vmem %s226, %s262
        %v264 = vld [vmem:[%s263] sm:$0x1]
        %s265 = scalar_lea.vmem [#allocation2], %s256
        %vm266 = vcmask 16384
        %267 = vst.msk [vmem:[%s265] sm:$0x1] %vm266, %v264
        %v268 = vadd.f32 %v264, 0.0
        %s269 = vtos %v268
        %271 = vrot.lane.b32.xlu0 %v268, 127
        %v272 = vpop.permute.xlu0 %271
        %s274 = vtos %v272
        %275 = vrot.lane.b32.xlu0 %v268, 126
        %v276 = vpop.permute.xlu0 %275
        %s278 = vtos %v276
        %v279 = vstv %s269
        %v280 = vsub.f32 %v251, %v279
        %v281 = vmul.f32 %v280, %v280
        %v282 = vstv %s274
        %v283 = vsub.f32 %v251, %v282
        %v284 = vmul.f32 %v283, %v283
        %v286 = vrot.slane %v284, 1
        %v288 = vadd.f32 %v281, %v286
        %v289 = vstv %s278
        %v290 = vsub.f32 %v251, %v289
        %v291 = vmul.f32 %v290, %v290
        %v293 = vrot.slane %v291, 2
        %v295 = vadd.f32 %v288, %v293
        %v296 = vmin.f32 %v261, %v295
        %vm297 = vcmask 516096
        %v298 = vsel %vm297, %v296, -inf
        %299 = vmax.xlane.f32.xlu0 %v298
        %v300 = vpop.xlane.xlu0 %299
        %v301 = vrot.slane %v300, 4
        %v302 = vmax.f32 %v300, %v301
        %v303 = vrot.slane %v302, 2
        %v304 = vmax.f32 %v302, %v303
        %v305 = vrot.slane %v304, 1
        %v306 = vmax.f32 %v304, %v305
        %s307 = vtos %v306
        %v308 = vstv %s307
        %vm309 = vcmp.eq.f32.partialorder %v296, %v308
        %v310 = vsel %vm309, %v253, 64
        %v311 = vsel %vm297, %v310, 2147483647
        %v312 = vand.u32 %v311, 65535
        %v313 = vshra.s32 %v311, 16
        %v314 = vcvt.s32.f32 %v312
        %v315 = vcvt.s32.f32 %v313
        %316 = vmin.xlane.f32.xlu0 %v315
        %v317 = vpop.xlane.xlu0 %316
        %vm318 = vcmp.eq.f32.partialorder %v315, %v317
        %v319 = vsel %vm318, %v314, inf
        %320 = vmin.xlane.f32.xlu0 %v319
        %v321 = vpop.xlane.xlu0 %320
        %v322 = vcvt.f32.s32 %v321
        %v323 = vcvt.f32.s32 %v317
        %v324 = vshll.u32 %v323, 16
        %v325 = vadd.s32 %v324, %v322
        %v326 = vrot.slane %v325, 4
        %vm327 = vcmp.lt.s32.totalorder %v325, %v326
        %v328 = vsel %vm327, %v325, %v326
        %v329 = vrot.slane %v328, 2
        %vm330 = vcmp.lt.s32.totalorder %v328, %v329
        %v331 = vsel %vm330, %v328, %v329
        %v332 = vrot.slane %v331, 1
        %vm333 = vcmp.lt.s32.totalorder %v331, %v332
        %v334 = vsel %vm333, %v331, %v332
        %s335 = vtos %v334
      $region33: #{group_forward.1} parent=27 // loop_footer
        %s260 = sadd.s32 1, %s256
      $region34: #{group_forward.1} parent=27 // loop_footer_branch
        %255 = sbr.rel target = $region30
      $region35: #{group_forward.1} parent=27 // loop_exit
        _
      %v336 = vld [vmem:[#allocation2] sm:$0xff]
      %v337 = vmul.f32 %v336, %v336
      %vm338 = vcmask 23552
      %v339 = vsel %vm338, %v337, 0.0
      %340 = vadd.xlane.f32.xlu0 %v339
      %v341 = vpop.xlane.xlu0 %340
      %v342 = vmul.f32 %v251, %v251
      %v344 = vrot.slane %v342, 1
      %v346 = vadd.f32 %v342, %v344
      %v347 = vrot.slane %v342, 2
      %v349 = vadd.f32 %v346, %v347
      %v351 = vsel %vm338, %v336, 0
      %vm353 = vcmask 1042432
      %v355 = vsel %vm353, %v251, 0
      %357 = vmatpush.msra.mxu0 0.0
      %358 = vmatpush.msra.mxu0 0.0
      %359 = vmatpush.msra.mxu0 0.0
      %360 = vmatpush.msra.mxu0 0.0
      %361 = vmatpush.msra.mxu0 0.0
      %362 = vmatpush.msra.mxu0 0.0
      %363 = vmatpush.msra.mxu0 0.0
      %364 = vmatpush.msra.mxu0 0.0
      %365 = vmatpush.msra.mxu0 0.0
      %366 = vmatpush.msra.mxu0 0.0
      %367 = vmatpush.msra.mxu0 0.0
      %368 = vmatpush.msra.mxu0 0.0
      %369 = vmatpush.msra.mxu0 0.0
      %370 = vmatpush.msra.mxu0 0.0
      %371 = vmatpush.msra.mxu0 0.0
      %372 = vmatpush.msra.mxu0 %v355
      %373 = vmatmul.f32.gmra.mxu0 %v351
      %v374 = vpop.f32.mrf.mxu0
      %v375 = vadd.f32 0.0, %v374
      %376 = vdwg.mxu0
      %v377 = vperm.slane %v349, 0
      %v378 = vadd.f32 %v341, %v377
      %v379 = vmul.f32 %v375, 2.0
      %v380 = vsub.f32 %v378, %v379
      loop: start=0, step=1, limit=8
      $region36: #{group_forward.1} parent=27 // loop_pre_header
        _
      $region37: #{group_forward.1} parent=27 // loop_header
        %s382 = sphi 0, %s386
        %p383 = scmp.ge.s32.totalorder %s382, 8
        %v387 = vphi %v380, %v415
      $region38: #{group_forward.1} parent=27 // loop_header_branch
        %385 = sbr.rel (%p383) target = $region42
      $region39: #{group_forward.1} parent=27 // loop_body
        %vm388 = vcmask 523264
        %v389 = vsel %vm388, %v387, inf
        %390 = vmin.xlane.f32.xlu0 %v389
        %v391 = vpop.xlane.xlu0 %390
        %vm392 = vcmp.eq.f32.partialorder %v387, %v391
        %v393 = vsel %vm392, %v253, 64
        %v394 = vsel %vm388, %v393, 2147483647
        %v395 = vand.u32 %v394, 65535
        %v396 = vshra.s32 %v394, 16
        %v397 = vcvt.s32.f32 %v395
        %v398 = vcvt.s32.f32 %v396
        %399 = vmin.xlane.f32.xlu0 %v398
        %v400 = vpop.xlane.xlu0 %399
        %vm401 = vcmp.eq.f32.partialorder %v398, %v400
        %v402 = vsel %vm401, %v397, inf
        %403 = vmin.xlane.f32.xlu0 %v402
        %v404 = vpop.xlane.xlu0 %403
        %v405 = vcvt.f32.s32 %v404
        %v406 = vcvt.f32.s32 %v400
        %v407 = vshll.u32 %v406, 16
        %v408 = vadd.s32 %v407, %v405
        %vm409 = vcmp.eq.s32.totalorder %v253, %v408
        %s410 = smul.u32 %s382, 8
        %v411 = vsel %vm409, 1, 0
        %v412 = vcvt.s32.f32 %v411
        %s413 = scalar_lea.vmem [#allocation3], %s410
        %414 = vst.msk [vmem:[%s413] sm:$0xff] %vm388, %v412
        %v415 = vsel %vm409, 1e+30, %v387
      $region40: #{group_forward.1} parent=27 // loop_footer
        %s386 = sadd.s32 1, %s382
      $region41: #{group_forward.1} parent=27 // loop_footer_branch
        %381 = sbr.rel target = $region37
      $region42: #{group_forward.1} parent=27 // loop_exit
        _
      %v416 = vld [vmem:[#allocation3] sm:$0xff]
      %v417 = vld [vmem:[#allocation3 + $0x8] sm:$0xff]
      %v418 = vld [vmem:[#allocation3 + $0x10] sm:$0xff]
      %v419 = vld [vmem:[#allocation3 + $0x18] sm:$0xff]
      %v420 = vld [vmem:[#allocation3 + $0x20] sm:$0xff]
      %v421 = vld [vmem:[#allocation3 + $0x28] sm:$0xff]
      %v422 = vld [vmem:[#allocation3 + $0x30] sm:$0xff]
      %v423 = vld [vmem:[#allocation3 + $0x38] sm:$0xff]
      %vm424 = vcmask 523264
      %v426 = vsel %vm424, %v416, 0
      %v429 = vsel %vm424, %v417, 0
      %v432 = vsel %vm424, %v418, 0
      %v435 = vsel %vm424, %v419, 0
      %v438 = vsel %vm424, %v420, 0
      %v441 = vsel %vm424, %v421, 0
      %v444 = vsel %vm424, %v422, 0
      %v447 = vsel %vm424, %v423, 0
      %449 = vmatpush.msra.mxu0 0.0
      %450 = vmatpush.msra.mxu0 0.0
      %451 = vmatpush.msra.mxu0 0.0
      %452 = vmatpush.msra.mxu0 0.0
      %453 = vmatpush.msra.mxu0 0.0
      %454 = vmatpush.msra.mxu0 0.0
      %455 = vmatpush.msra.mxu0 0.0
      %456 = vmatpush.msra.mxu0 0.0
      %457 = vmatpush.msra.mxu0 %v250
      %458 = vmatpush.msra.mxu0 %v249
      %459 = vmatpush.msra.mxu0 %v248
      %460 = vmatpush.msra.mxu0 %v247
      %461 = vmatpush.msra.mxu0 %v246
      %462 = vmatpush.msra.mxu0 %v245
      %463 = vmatpush.msra.mxu0 %v244
      %464 = vmatpush.msra.mxu0 %v243
      %465 = vmatmul.f32.gmra.mxu0 %v426
      %v466 = vpop.f32.mrf.mxu0
      %v467 = vadd.f32 0.0, %v466
      %468 = vmatmul.f32.gmra.mxu0 %v429
      %v469 = vpop.f32.mrf.mxu0
      %v470 = vadd.f32 0.0, %v469
      %471 = vmatmul.f32.gmra.mxu0 %v432
      %v472 = vpop.f32.mrf.mxu0
      %v473 = vadd.f32 0.0, %v472
      %474 = vmatmul.f32.gmra.mxu0 %v435
      %v475 = vpop.f32.mrf.mxu0
      %v476 = vadd.f32 0.0, %v475
      %477 = vmatmul.f32.gmra.mxu0 %v438
      %v478 = vpop.f32.mrf.mxu0
      %v479 = vadd.f32 0.0, %v478
      %480 = vmatmul.f32.gmra.mxu0 %v441
      %v481 = vpop.f32.mrf.mxu0
      %v482 = vadd.f32 0.0, %v481
      %483 = vmatmul.f32.gmra.mxu0 %v444
      %v484 = vpop.f32.mrf.mxu0
      %v485 = vadd.f32 0.0, %v484
      %486 = vmatmul.f32.gmra.mxu0 %v447
      %v487 = vpop.f32.mrf.mxu0
      %v488 = vadd.f32 0.0, %v487
      %489 = vdwg.mxu0
      %490 = vxpose.xlu0.b32.start [1/16] %v467, 128
      %491 = vxpose.xlu0.b32.cont [2/16] %v470, 128
      %492 = vxpose.xlu0.b32.cont [3/16] %v473, 128
      %493 = vxpose.xlu0.b32.cont [4/16] %v476, 128
      %494 = vxpose.xlu0.b32.cont [5/16] %v479, 128
      %495 = vxpose.xlu0.b32.cont [6/16] %v482, 128
      %496 = vxpose.xlu0.b32.cont [7/16] %v485, 128
      %497 = vxpose.xlu0.b32.cont [8/16] %v488, 128
      %498 = vxpose.xlu0.b32.cont [9/16] 0.0, 128
      %499 = vxpose.xlu0.b32.cont [10/16] 0.0, 128
      %500 = vxpose.xlu0.b32.cont [11/16] 0.0, 128
      %501 = vxpose.xlu0.b32.cont [12/16] 0.0, 128
      %502 = vxpose.xlu0.b32.cont [13/16] 0.0, 128
      %503 = vxpose.xlu0.b32.cont [14/16] 0.0, 128
      %504 = vxpose.xlu0.b32.cont [15/16] 0.0, 128
      %505 = vxpose.xlu0.b32.end [16/16] 0.0, 128
      %v506 = vpop.trf.xlu0
      %v507 = vpop.trf.xlu0
      %v508 = vpop.trf.xlu0
      %v509 = vpop.trf.xlu0
      %v510 = vpop.trf.xlu0
      %v511 = vpop.trf.xlu0
      %v512 = vpop.trf.xlu0
      %v513 = vpop.trf.xlu0
      %v514 = vpop.trf.xlu0
      %v515 = vpop.trf.xlu0
      %v516 = vpop.trf.xlu0
      %v517 = vpop.trf.xlu0
      %v518 = vpop.trf.xlu0
      %v519 = vpop.trf.xlu0
      %v520 = vpop.trf.xlu0
      %v521 = vpop.trf.xlu0
      %522 = vxpose.xlu0.b32.start [1/16] %v336, 128
      %523 = vxpose.xlu0.b32.cont [2/16] 0.0, 128
      %524 = vxpose.xlu0.b32.cont [3/16] 0.0, 128
      %525 = vxpose.xlu0.b32.cont [4/16] 0.0, 128
      %526 = vxpose.xlu0.b32.cont [5/16] 0.0, 128
      %527 = vxpose.xlu0.b32.cont [6/16] 0.0, 128
      %528 = vxpose.xlu0.b32.cont [7/16] 0.0, 128
      %529 = vxpose.xlu0.b32.cont [8/16] 0.0, 128
      %530 = vxpose.xlu0.b32.cont [9/16] 0.0, 128
      %531 = vxpose.xlu0.b32.cont [10/16] 0.0, 128
      %532 = vxpose.xlu0.b32.cont [11/16] 0.0, 128
      %533 = vxpose.xlu0.b32.cont [12/16] 0.0, 128
      %534 = vxpose.xlu0.b32.cont [13/16] 0.0, 128
      %535 = vxpose.xlu0.b32.cont [14/16] 0.0, 128
      %536 = vxpose.xlu0.b32.cont [15/16] 0.0, 128
      %537 = vxpose.xlu0.b32.end [16/16] 0.0, 128
      %v538 = vpop.trf.xlu0
      %v539 = vpop.trf.xlu0
      %v540 = vpop.trf.xlu0
      %v541 = vpop.trf.xlu0
      %v542 = vpop.trf.xlu0
      %v543 = vpop.trf.xlu0
      %v544 = vpop.trf.xlu0
      %v545 = vpop.trf.xlu0
      %v546 = vpop.trf.xlu0
      %v547 = vpop.trf.xlu0
      %v548 = vpop.trf.xlu0
      %v549 = vpop.trf.xlu0
      %v550 = vpop.trf.xlu0
      %v551 = vpop.trf.xlu0
      %v552 = vpop.trf.xlu0
      %v553 = vpop.trf.xlu0
      %vm554 = vcmask 59392
      %555 = vst.msk [vmem:[%s242] sm:$0x7] %vm554, %v538
      %557 = vrot.lane.b32.xlu0 %v538, 8
      %v558 = vpop.permute.xlu0 %557
      %560 = vrot.lane.b32.xlu0 %v538, 16
      %v561 = vpop.permute.xlu0 %560
      %563 = vrot.lane.b32.xlu0 %v538, 24
      %v564 = vpop.permute.xlu0 %563
      %566 = vrot.lane.b32.xlu0 %v538, 32
      %v567 = vpop.permute.xlu0 %566
      %569 = vrot.lane.b32.xlu0 %v538, 40
      %v570 = vpop.permute.xlu0 %569
      %572 = vrot.lane.b32.xlu0 %v538, 48
      %v573 = vpop.permute.xlu0 %572
      %575 = vrot.lane.b32.xlu0 %v538, 56
      %v576 = vpop.permute.xlu0 %575
      %vm578 = vcmask 64512
      %v579 = vsel %vm578, %v538, %v558
      %vm580 = vcmask 130048
      %v581 = vsel %vm580, %v579, %v561
      %vm582 = vcmask 195584
      %v583 = vsel %vm582, %v581, %v564
      %vm584 = vcmask 261120
      %v585 = vsel %vm584, %v583, %v567
      %vm586 = vcmask 326656
      %v587 = vsel %vm586, %v585, %v570
      %vm588 = vcmask 392192
      %v589 = vsel %vm588, %v587, %v573
      %vm590 = vcmask 457728
      %v591 = vsel %vm590, %v589, %v576
      %v592 = vsub.f32 %v506, %v591
      %vm593 = vcmask 518144
      %594 = vst.msk [vmem:[%s234] sm:$0x7] %vm593, %v592
      %vm595 = vcmask 521219
      %596 = vst.msk [vmem:[%s238 - $0x3] sm:$0x38] %vm595, %v506
      %p597 = scmp.lt.s32.totalorder %s25, 1
      %s598 = scalar_select %p597, %s25, 1
      %s599 = smul.addr %s598, 4
      %s600 = scalar_lea.vmem %s3, %s599
      %p601 = scmp.lt.s32.totalorder %s25, 1
      %s602 = scalar_select %p601, %s25, 1
      %s603 = smul.addr %s602, 4
      %s604 = scalar_lea.vmem %s4, %s603
      %p605 = scmp.lt.s32.totalorder %s25, 1
      %s606 = scalar_select %p605, %s25, 1
      %s607 = smul.addr %s606, 4
      %s608 = scalar_lea.vmem %s5, %s607
      // Predicated region
      $region43: #{group_forward.1} parent=27 // pred_check
        %p609 = pneg %p95
      $region44: #{group_forward.1} parent=27 // pred_check_branch
        %611 = sbr.rel (%p609) target = $region46
      $region45: #{group_forward.1} parent=27 // pred_region
        _
      $region46: #{group_forward.1} parent=27 // pred_fallthru
        _
      // Predicated region
      $region47: #{group_forward.1} parent=27 // pred_check
        %p612 = pneg %p121
      $region48: #{group_forward.1} parent=27 // pred_check_branch
        %614 = sbr.rel (%p612) target = $region50
      $region49: #{group_forward.1} parent=27 // pred_region
        _
      $region50: #{group_forward.1} parent=27 // pred_fallthru
        _
      // Predicated region
      $region51: #{group_forward.1} parent=27 // pred_check
        %p615 = pneg %p147
      $region52: #{group_forward.1} parent=27 // pred_check_branch
        %617 = sbr.rel (%p615) target = $region54
      $region53: #{group_forward.1} parent=27 // pred_region
        _
      $region54: #{group_forward.1} parent=27 // pred_fallthru
        _
    $region28: #{group_forward.1} parent=5 // pred_fallthru
      _
    %p618 = scmp.le.s32.totalorder 2, %s20
    // Predicated region
    $region55: #{group_forward.1} parent=5 // pred_check
      %p619 = pneg %p618
    $region56: #{group_forward.1} parent=5 // pred_check_branch
      %621 = sbr.rel (%p619) target = $region58
    $region57: #{group_forward.1} parent=5 // pred_region
      %s622 = ssub.s32 %s20, 2
      // Predicated region
      $region59: #{group_forward.1} parent=57 // pred_check
        %p623 = pneg %p101
      $region60: #{group_forward.1} parent=57 // pred_check_branch
        %625 = sbr.rel (%p623) target = $region62
      $region61: #{group_forward.1} parent=57 // pred_region
        %p626 = scmp.lt.s32.totalorder %s26, 1
        %s627 = scalar_select %p626, %s26, 1
        %s628 = smul.addr %s627, 4
        %s629 = scalar_lea.vmem %s3, %s628
      $region62: #{group_forward.1} parent=57 // pred_fallthru
        _
      // Predicated region
      $region63: #{group_forward.1} parent=57 // pred_check
        %p630 = pneg %p127
      $region64: #{group_forward.1} parent=57 // pred_check_branch
        %632 = sbr.rel (%p630) target = $region66
      $region65: #{group_forward.1} parent=57 // pred_region
        %p633 = scmp.lt.s32.totalorder %s26, 1
        %s634 = scalar_select %p633, %s26, 1
        %s635 = smul.addr %s634, 4
        %s636 = scalar_lea.vmem %s4, %s635
      $region66: #{group_forward.1} parent=57 // pred_fallthru
        _
      // Predicated region
      $region67: #{group_forward.1} parent=57 // pred_check
        %p637 = pneg %p153
      $region68: #{group_forward.1} parent=57 // pred_check_branch
        %639 = sbr.rel (%p637) target = $region70
      $region69: #{group_forward.1} parent=57 // pred_region
        %p640 = scmp.lt.s32.totalorder %s26, 1
        %s641 = scalar_select %p640, %s26, 1
        %s642 = smul.addr %s641, 4
        %s643 = scalar_lea.vmem %s5, %s642
      $region70: #{group_forward.1} parent=57 // pred_fallthru
        _
    $region58: #{group_forward.1} parent=5 // pred_fallthru
      _
  $region6: #{group_forward.1} parent=0 // loop_footer
    %s24 = sadd.s32 1, %s20
  $region7: #{group_forward.1} parent=0 // loop_footer_branch
    %19 = sbr.rel target = $region3
  $region8: #{group_forward.1} parent=0 // loop_exit
    _

</llo_original>
